<compile_context>
chip_gen: v6e
topology: v6e:2x2x1
jax: 0.10.0
libtpu: 0.0.40
codegen_flags: <defaults>
</compile_context>

<pallas_src>
import functools

import jax
import jax.numpy as jnp
from jax import lax
from jax.experimental import pallas as pl
from jax.experimental.pallas import tpu as pltpu

GAMMA = 2.0
IGNORE_INDEX = -1


def _round_up(x, m):
    return (x + m - 1) // m * m


def _focal_kernel(logits_ref, tgt_ref, alpha_ref, part_ref, *,
                  gamma, ignore_index, use_alpha):
    # logits_ref: (TN, C) in native dtype, tgt_ref: (TN, 1) i32,
    # alpha_ref: (1, C) f32, part_ref: (1, 8, 128) f32 per-block output slab
    # (lanes [0:64) carry this block's focal sum, lanes [64:128) its valid count).
    logits = logits_ref[...].astype(jnp.float32)            # (TN, C)
    tgt = tgt_ref[...]                                       # (TN, 1) int32
    tn, c = logits.shape

    valid = tgt != ignore_index                              # (TN, 1) bool
    tgt_safe = jnp.where(valid, tgt, 0)                      # clamp ignored to class 0

    col = lax.broadcasted_iota(jnp.int32, (tn, c), 1)        # class indices
    mask = col == tgt_safe                                   # (TN, C) bool, no f32 onehot

    # cross entropy (reduction='none'): logsumexp - logit at target class
    m = jnp.max(logits, axis=-1, keepdims=True)
    lse = m + jnp.log(jnp.sum(jnp.exp(logits - m), axis=-1, keepdims=True))
    logit_t = jnp.sum(jnp.where(mask, logits, 0.0), axis=-1, keepdims=True)
    ce = jnp.where(valid, lse - logit_t, 0.0)                # (TN, 1)

    p_t = jnp.exp(-ce)
    base = 1.0 - p_t
    g = float(gamma)
    if g == 2.0:
        mod = base * base                                    # single VPU multiply
    elif g.is_integer() and g >= 0.0:
        mod = lax.integer_pow(base, int(g))
    else:
        # float pow lowers to exp(g*log(x)); clamp base to avoid NaN from rounding
        mod = jnp.power(jnp.maximum(base, 0.0), g)
    focal = mod * ce                                         # (TN, 1)

    if use_alpha:
        alpha_t = jnp.sum(jnp.where(mask, alpha_ref[...], 0.0),
                          axis=-1, keepdims=True)            # alpha[target]
        focal = alpha_t * focal
    focal = jnp.where(valid, focal, 0.0)                     # zero ignored rows

    s_part = jnp.sum(focal, keepdims=True)                   # (1, 1)
    c_part = jnp.sum(valid.astype(jnp.float32), keepdims=True)

    lane = lax.broadcasted_iota(jnp.int32, (1, 8, 128), 2)
    s_b = jnp.broadcast_to(s_part.reshape(1, 1, 1), (1, 8, 128))
    c_b = jnp.broadcast_to(c_part.reshape(1, 1, 1), (1, 8, 128))
    part_ref[...] = jnp.where(lane < 64, s_b, c_b)


def focal_loss(logits, targets, alpha=None, *, gamma=GAMMA,
               ignore_index=IGNORE_INDEX, reduction="mean", block_n=512):
    """logits: (N, C) float, targets: (N,) int, alpha: (C,) float or None.

    block_n: row-tile size.  512 is a safe default on v5e/v6e/v7x; on v6e with
    very large C you can push toward 1024-2048, but cap ~512-1024 on v7x
    (64 MiB physical VMEM).
    """
    n, c = logits.shape

    # Tile sizing + ragged-tail handling: pad N up to a multiple of block_n with
    # ignore_index rows (they contribute 0 to both sum and count).
    block_n = max(8, _round_up(min(block_n, _round_up(n, 8)), 8))
    n_pad = _round_up(n, block_n)
    num_blocks = n_pad // block_n

    tgt = targets.astype(jnp.int32)
    if n_pad != n:
        logits = jnp.pad(logits, ((0, n_pad - n), (0, 0)))
        tgt = jnp.pad(tgt, (0, n_pad - n), constant_values=ignore_index)
    tgt2d = tgt.reshape(n_pad, 1)

    use_alpha = alpha is not None
    alpha2d = (alpha.astype(jnp.float32) if use_alpha
               else jnp.ones((c,), jnp.float32)).reshape(1, c)

    kernel = functools.partial(_focal_kernel, gamma=gamma,
                               ignore_index=ignore_index, use_alpha=use_alpha)

    cost = pl.CostEstimate(
        flops=10 * n_pad * c,
        transcendentals=n_pad * (c + 2),
        bytes_accessed=(n_pad * c * logits.dtype.itemsize + n_pad * 4 + c * 4
                        + num_blocks * 8 * 128 * 4),
    )

    parts = pl.pallas_call(
        kernel,
        out_shape=jax.ShapeDtypeStruct((num_blocks, 8, 128), jnp.float32),
        grid_spec=pltpu.PrefetchScalarGridSpec(
            num_scalar_prefetch=0,
            grid=(num_blocks,),
            in_specs=[
                pl.BlockSpec((block_n, c), lambda i: (i, 0)),
                pl.BlockSpec((block_n, 1), lambda i: (i, 0)),
                pl.BlockSpec((1, c), lambda i: (0, 0)),
            ],
            out_specs=pl.BlockSpec((1, 8, 128), lambda i: (i, 0, 0)),
        ),
        compiler_params=pltpu.CompilerParams(
            dimension_semantics=("parallel",),      # no resident accumulator -> megacore OK
            vmem_limit_bytes=32 * 1024 * 1024,
        ),
        cost_estimate=cost,
    )(logits, tgt2d, alpha2d)

    s = jnp.sum(parts[:, 0, 0])
    cnt = jnp.sum(parts[:, 0, 64])
    if reduction == "mean":
        return s / jnp.maximum(cnt, 1.0)
    elif reduction == "sum":
        return s
    else:
        raise NotImplementedError("per-element ('none') reduction not wired up here")
        # TODO(synk): expose per-element focal loss output for reduction='none'


def _reference_focal_loss(logits, targets, alpha, gamma=GAMMA, ignore_index=IGNORE_INDEX):
    logits = logits.astype(jnp.float32)
    valid = targets != ignore_index
    tgt_safe = jnp.where(valid, targets, 0)
    lse = jax.scipy.special.logsumexp(logits, axis=-1)
    logit_t = jnp.take_along_axis(logits, tgt_safe[:, None], axis=-1)[:, 0]
    ce = jnp.where(valid, lse - logit_t, 0.0)
    p_t = jnp.exp(-ce)
    focal = (1.0 - p_t) ** gamma * ce
    alpha_t = alpha[tgt_safe]
    focal = jnp.where(valid, alpha_t * focal, 0.0)
    return focal.sum() / jnp.maximum(valid.sum().astype(jnp.float32), 1.0)


if __name__ == "__main__":
    key = jax.random.PRNGKey(0)
    k1, k2, k3, k4 = jax.random.split(key, 4)

    # Case 1: N multiple of 8, per-class alpha, some ignored rows.
    N, C = 64, 8
    logits = jax.random.normal(k1, (N, C), dtype=jnp.float32)
    targets = jax.random.randint(k2, (N,), 0, C, dtype=jnp.int32)
    targets = jnp.where(jnp.arange(N) % 7 == 0, IGNORE_INDEX, targets)
    alpha = jnp.linspace(0.5, 1.5, C, dtype=jnp.float32)

    out = jax.block_until_ready(focal_loss(logits, targets, alpha))
    ref = _reference_focal_loss(logits, targets, alpha)
    assert jnp.allclose(out, ref, rtol=1e-5, atol=1e-6), (out, ref)

    # Case 2: ragged N (exercises pad-to-tile path), alpha=None path.
    N2 = 50
    logits2 = jax.random.normal(k3, (N2, C), dtype=jnp.float32)
    targets2 = jax.random.randint(k4, (N2,), 0, C, dtype=jnp.int32)
    targets2 = jnp.where(jnp.arange(N2) % 5 == 0, IGNORE_INDEX, targets2)

    out2 = jax.block_until_ready(focal_loss(logits2, targets2, None))
    ref2 = _reference_focal_loss(logits2, targets2, jnp.ones((C,), jnp.float32))
    assert jnp.allclose(out2, ref2, rtol=1e-5, atol=1e-6), (out2, ref2)

    print("KERNEL_OK")
</pallas_src>

<mosaic_0001>
module attributes {stable_mosaic.version = 11 : i64} {
  func.func @_focal_kernel(%arg0: i32, %arg1: memref<64x8xf32, #tpu.memory_space<vmem>>, %arg2: memref<64x1xi32, #tpu.memory_space<vmem>>, %arg3: memref<1x8xf32, #tpu.memory_space<vmem>>, %arg4: memref<1x8x128xf32, #tpu.memory_space<vmem>>) attributes {dimension_semantics = [#tpu.dimension_semantics<parallel>], iteration_bounds = array<i64: 1>, scalar_prefetch = 0 : i64, scratch_operands = 0 : i64, tpu.core_type = #tpu.core_type<tc>, window_params = [{transform_indices = @transform_0, window_bounds = array<i64: 64, 8>}, {transform_indices = @transform_1, window_bounds = array<i64: 64, 1>}, {pipeline_mode = #tpu.pipeline_mode<synchronous>, transform_indices = @transform_2, window_bounds = array<i64: 1, 8>}, {transform_indices = @transform_3, window_bounds = array<i64: 1, 8, 128>}]} {
    %c0 = arith.constant 0 : index
    %c0_0 = arith.constant 0 : index
    %0 = vector.load %arg1[%c0, %c0_0] : memref<64x8xf32, #tpu.memory_space<vmem>>, vector<64x8xf32>
    %c0_1 = arith.constant 0 : index
    %c0_2 = arith.constant 0 : index
    %1 = vector.load %arg2[%c0_1, %c0_2] : memref<64x1xi32, #tpu.memory_space<vmem>>, vector<64x1xi32>
    %c-1_i32 = arith.constant -1 : i32
    %2 = vector.broadcast %c-1_i32 : i32 to vector<64x1xi32>
    %3 = arith.cmpi ne, %1, %2 : vector<64x1xi32>
    %c0_i32 = arith.constant 0 : i32
    %4 = vector.broadcast %c0_i32 : i32 to vector<64x1xi32>
    %5 = arith.select %3, %1, %4 : vector<64x1xi1>, vector<64x1xi32>
    %6 = tpu.iota {dimensions = array<i32: 1>} : vector<64x8xi32>
    %7 = vector.broadcast %5 : vector<64x1xi32> to vector<64x8xi32>
    %8 = arith.cmpi eq, %6, %7 : vector<64x8xi32>
    %cst = arith.constant dense<0xFF800000> : vector<64xf32>
    %9 = vector.multi_reduction <maximumf>, %0, %cst [1] : vector<64x8xf32> to vector<64xf32>
    %10 = vector.shape_cast %9 : vector<64xf32> to vector<64x1xf32>
    %11 = vector.broadcast %10 : vector<64x1xf32> to vector<64x8xf32>
    %12 = arith.subf %0, %11 : vector<64x8xf32>
    %13 = math.exp %12 : vector<64x8xf32>
    %cst_3 = arith.constant dense<0.000000e+00> : vector<64xf32>
    %14 = vector.multi_reduction <add>, %13, %cst_3 [1] : vector<64x8xf32> to vector<64xf32>
    %15 = vector.shape_cast %14 : vector<64xf32> to vector<64x1xf32>
    %16 = math.log %15 : vector<64x1xf32>
    %17 = arith.addf %10, %16 : vector<64x1xf32>
    %cst_4 = arith.constant 0.000000e+00 : f32
    %18 = vector.broadcast %cst_4 : f32 to vector<64x8xf32>
    %19 = arith.select %8, %0, %18 : vector<64x8xi1>, vector<64x8xf32>
    %cst_5 = arith.constant dense<0.000000e+00> : vector<64xf32>
    %20 = vector.multi_reduction <add>, %19, %cst_5 [1] : vector<64x8xf32> to vector<64xf32>
    %21 = vector.shape_cast %20 : vector<64xf32> to vector<64x1xf32>
    %22 = arith.subf %17, %21 : vector<64x1xf32>
    %cst_6 = arith.constant 0.000000e+00 : f32
    %23 = vector.broadcast %cst_6 : f32 to vector<64x1xf32>
    %24 = arith.select %3, %22, %23 : vector<64x1xi1>, vector<64x1xf32>
    %cst_7 = arith.constant 0.000000e+00 : f32
    %25 = vector.broadcast %cst_7 : f32 to vector<64x1xf32>
    %26 = arith.subf %25, %24 : vector<64x1xf32>
    %27 = math.exp %26 : vector<64x1xf32>
    %cst_8 = arith.constant 1.000000e+00 : f32
    %28 = vector.broadcast %cst_8 : f32 to vector<64x1xf32>
    %29 = arith.subf %28, %27 : vector<64x1xf32>
    %30 = arith.mulf %29, %29 : vector<64x1xf32>
    %31 = arith.mulf %30, %24 : vector<64x1xf32>
    %c0_9 = arith.constant 0 : index
    %c0_10 = arith.constant 0 : index
    %32 = vector.load %arg3[%c0_9, %c0_10] : memref<1x8xf32, #tpu.memory_space<vmem>>, vector<1x8xf32>
    %cst_11 = arith.constant 0.000000e+00 : f32
    %33 = vector.shape_cast %32 : vector<1x8xf32> to vector<1x8xf32>
    %34 = vector.broadcast %33 : vector<1x8xf32> to vector<64x8xf32>
    %35 = vector.broadcast %cst_11 : f32 to vector<64x8xf32>
    %36 = arith.select %8, %34, %35 : vector<64x8xi1>, vector<64x8xf32>
    %cst_12 = arith.constant dense<0.000000e+00> : vector<64xf32>
    %37 = vector.multi_reduction <add>, %36, %cst_12 [1] : vector<64x8xf32> to vector<64xf32>
    %38 = vector.shape_cast %37 : vector<64xf32> to vector<64x1xf32>
    %39 = arith.mulf %38, %31 : vector<64x1xf32>
    %cst_13 = arith.constant 0.000000e+00 : f32
    %40 = vector.broadcast %cst_13 : f32 to vector<64x1xf32>
    %41 = arith.select %3, %39, %40 : vector<64x1xi1>, vector<64x1xf32>
    %42 = vector.shape_cast %41 : vector<64x1xf32> to vector<1x64x1xf32>
    %cst_14 = arith.constant dense<0.000000e+00> : vector<1xf32>
    %43 = vector.multi_reduction <add>, %42, %cst_14 [1, 2] : vector<1x64x1xf32> to vector<1xf32>
    %44 = vector.shape_cast %43 : vector<1xf32> to vector<1x1x1xf32>
    %45 = vector.extract %44[0, 0, 0] : f32 from vector<1x1x1xf32>
    %46 = vector.broadcast %45 : f32 to vector<1x1xf32>
    %47 = arith.extui %3 : vector<64x1xi1> to vector<64x1xi32>
    %48 = arith.sitofp %47 : vector<64x1xi32> to vector<64x1xf32>
    %49 = vector.shape_cast %48 : vector<64x1xf32> to vector<1x64x1xf32>
    %cst_15 = arith.constant dense<0.000000e+00> : vector<1xf32>
    %50 = vector.multi_reduction <add>, %49, %cst_15 [1, 2] : vector<1x64x1xf32> to vector<1xf32>
    %51 = vector.shape_cast %50 : vector<1xf32> to vector<1x1x1xf32>
    %52 = vector.extract %51[0, 0, 0] : f32 from vector<1x1x1xf32>
    %53 = vector.broadcast %52 : f32 to vector<1x1xf32>
    %54 = tpu.iota {dimensions = array<i32: 2>} : vector<1x8x128xi32>
    %55 = vector.shape_cast %46 : vector<1x1xf32> to vector<1x1x1xf32>
    %56 = vector.shape_cast %55 : vector<1x1x1xf32> to vector<1x1x1xf32>
    %57 = vector.broadcast %56 : vector<1x1x1xf32> to vector<1x8x128xf32>
    %58 = vector.shape_cast %53 : vector<1x1xf32> to vector<1x1x1xf32>
    %59 = vector.shape_cast %58 : vector<1x1x1xf32> to vector<1x1x1xf32>
    %60 = vector.broadcast %59 : vector<1x1x1xf32> to vector<1x8x128xf32>
    %c64_i32 = arith.constant 64 : i32
    %61 = vector.broadcast %c64_i32 : i32 to vector<1x8x128xi32>
    %62 = arith.cmpi slt, %54, %61 : vector<1x8x128xi32>
    %63 = arith.select %62, %57, %60 : vector<1x8x128xi1>, vector<1x8x128xf32>
    %c0_16 = arith.constant 0 : index
    %c0_17 = arith.constant 0 : index
    %c0_18 = arith.constant 0 : index
    %64 = vector.load %arg4[%c0_16, %c0_17, %c0_18] : memref<1x8x128xf32, #tpu.memory_space<vmem>>, vector<1x8x128xf32>
    tpu.vector_store %arg4[%c0_16, %c0_17, %c0_18], %63 {strides = array<i32>} : memref<1x8x128xf32, #tpu.memory_space<vmem>>, vector<1x8x128xf32>,
    return
  }
  func.func @transform_0(%arg0: i32) -> (i32, i32) {
    %c0_i32 = arith.constant 0 : i32
    %c0_i32_0 = arith.constant 0 : i32
    return %arg0, %c0_i32 : i32, i32
  }
  func.func @transform_1(%arg0: i32) -> (i32, i32) {
    %c0_i32 = arith.constant 0 : i32
    %c0_i32_0 = arith.constant 0 : i32
    return %arg0, %c0_i32 : i32, i32
  }
  func.func @transform_2(%arg0: i32) -> (i32, i32) {
    %c0_i32 = arith.constant 0 : i32
    %c0_i32_0 = arith.constant 0 : i32
    %c0_i32_1 = arith.constant 0 : i32
    return %c0_i32, %c0_i32_0 : i32, i32
  }
  func.func @transform_3(%arg0: i32) -> (i32, i32, i32) {
    %c0_i32 = arith.constant 0 : i32
    %c0_i32_0 = arith.constant 0 : i32
    %c0_i32_1 = arith.constant 0 : i32
    return %arg0, %c0_i32, %c0_i32_0 : i32, i32, i32
  }
}

</mosaic_0001>

<llo_original>
// kernel: tpu_custom_call.1
$region0: #{tpu_custom_call.1}
  #allocation0 [shape = 'u32[]', space=smem, size = 0x4, offset = 0x4, fixed_abs, tag = 'smem constant byte address 0x4 - core index']
  #allocation1 [shape = 'u32[144,128]{1,0:T(1,128)}', space=vmem, size = 0x12000, scoped, tag = 'internal scratch']
  %s0 = inlined_call_operand.vmem [shape: f32[64,8], index: 0, kind: input, shape index: {}]
  %s1 = inlined_call_operand.vmem [shape: s32[64,1], index: 1, kind: input, shape index: {}]
  %s2 = inlined_call_operand.vmem [shape: f32[1,8], index: 2, kind: input, shape index: {}]
  %s3 = inlined_call_operand.hbm [shape: f32[1,8,128], index: 3, kind: output, shape index: {}]
  %s4 = sld [smem:[#allocation0]]
  $region22: #{tpu_custom_call.1} parent=0
    _
  %s6 = ssub.s32 1, %s4
  %s7 = scalar_select 0, %s6, %s4
  $region1: #{tpu_custom_call.1} parent=0
    #allocation2 [shape = 'u8[4096]{0}', space=vmem, size = 0x1000, scoped, tag = 'output window, operand 0, single buffered']
    #allocation3 [shape = 's32[1]{0}', space=sflag, size = 0x4, scoped, tag = 'scoped memory for tpu_custom_call.1']
    %8 = vsyncpa [#allocation3], 0
    // Predicated region
    $region2: #{tpu_custom_call.1} parent=1 // pred_check
      _
    $region3: #{tpu_custom_call.1} parent=1 // pred_check_branch
      %10 = sbr.rel (0) target = $region5
    $region4: #{tpu_custom_call.1} parent=1 // pred_region
      _
    $region5: #{tpu_custom_call.1} parent=1 // pred_fallthru
      _
    // Predicated region
    $region6: #{tpu_custom_call.1} parent=1 // pred_check
      _
    $region7: #{tpu_custom_call.1} parent=1 // pred_check_branch
      %12 = sbr.rel (0) target = $region9
    $region8: #{tpu_custom_call.1} parent=1 // pred_region
      _
    $region9: #{tpu_custom_call.1} parent=1 // pred_fallthru
      _
    // Predicated region
    $region10: #{tpu_custom_call.1} parent=1 // pred_check
      _
    $region11: #{tpu_custom_call.1} parent=1 // pred_check_branch
      %14 = sbr.rel (0) target = $region13
    $region12: #{tpu_custom_call.1} parent=1 // pred_region
      _
    $region13: #{tpu_custom_call.1} parent=1 // pred_fallthru
      _
    %v15 = vld [vmem:[%s0] sm:$0xff]
    %v16 = vld [vmem:[%s0 + $0x8] sm:$0xff]
    %v17 = vld [vmem:[%s0 + $0x10] sm:$0xff]
    %v18 = vld [vmem:[%s0 + $0x18] sm:$0xff]
    %v19 = vld [vmem:[%s0 + $0x20] sm:$0xff]
    %v20 = vld [vmem:[%s0 + $0x28] sm:$0xff]
    %v21 = vld [vmem:[%s0 + $0x30] sm:$0xff]
    %v22 = vld [vmem:[%s0 + $0x38] sm:$0xff]
    %v23 = vld [vmem:[%s1] sm:$0xff]
    %v24 = vld [vmem:[%s1 + $0x8] sm:$0xff]
    %v25 = vld [vmem:[%s1 + $0x10] sm:$0xff]
    %v26 = vld [vmem:[%s1 + $0x18] sm:$0xff]
    %v27 = vld [vmem:[%s1 + $0x20] sm:$0xff]
    %v28 = vld [vmem:[%s1 + $0x28] sm:$0xff]
    %v29 = vld [vmem:[%s1 + $0x30] sm:$0xff]
    %v30 = vld [vmem:[%s1 + $0x38] sm:$0xff]
    %vm31 = vcmp.ne.s32.totalorder %v23, 4294967295
    %vm32 = vcmp.ne.s32.totalorder %v24, 4294967295
    %vm33 = vcmp.ne.s32.totalorder %v25, 4294967295
    %vm34 = vcmp.ne.s32.totalorder %v26, 4294967295
    %vm35 = vcmp.ne.s32.totalorder %v27, 4294967295
    %vm36 = vcmp.ne.s32.totalorder %v28, 4294967295
    %vm37 = vcmp.ne.s32.totalorder %v29, 4294967295
    %vm38 = vcmp.ne.s32.totalorder %v30, 4294967295
    %v39 = vsel %vm31, %v23, 0
    %v40 = vsel %vm32, %v24, 0
    %v41 = vsel %vm33, %v25, 0
    %v42 = vsel %vm34, %v26, 0
    %v43 = vsel %vm35, %v27, 0
    %v44 = vsel %vm36, %v28, 0
    %v45 = vsel %vm37, %v29, 0
    %v46 = vsel %vm38, %v30, 0
    %v47 = vlaneseq
    %v48 = vand.u32 %v47, 127
    %49 = vset.pattern.permute.xlu0 0
    %50 = vperm.xlu0 %49, %v39
    %v51 = vpop.permute.xlu0 %50
    %52 = vset.pattern.permute.xlu0 0
    %53 = vperm.xlu0 %52, %v40
    %v54 = vpop.permute.xlu0 %53
    %55 = vset.pattern.permute.xlu0 0
    %56 = vperm.xlu0 %55, %v41
    %v57 = vpop.permute.xlu0 %56
    %58 = vset.pattern.permute.xlu0 0
    %59 = vperm.xlu0 %58, %v42
    %v60 = vpop.permute.xlu0 %59
    %61 = vset.pattern.permute.xlu0 0
    %62 = vperm.xlu0 %61, %v43
    %v63 = vpop.permute.xlu0 %62
    %64 = vset.pattern.permute.xlu0 0
    %65 = vperm.xlu0 %64, %v44
    %v66 = vpop.permute.xlu0 %65
    %67 = vset.pattern.permute.xlu0 0
    %68 = vperm.xlu0 %67, %v45
    %v69 = vpop.permute.xlu0 %68
    %70 = vset.pattern.permute.xlu0 0
    %71 = vperm.xlu0 %70, %v46
    %v72 = vpop.permute.xlu0 %71
    %vm73 = vcmp.eq.s32.totalorder %v48, %v51
    %vm74 = vcmp.eq.s32.totalorder %v48, %v54
    %vm75 = vcmp.eq.s32.totalorder %v48, %v57
    %vm76 = vcmp.eq.s32.totalorder %v48, %v60
    %vm77 = vcmp.eq.s32.totalorder %v48, %v63
    %vm78 = vcmp.eq.s32.totalorder %v48, %v66
    %vm79 = vcmp.eq.s32.totalorder %v48, %v69
    %vm80 = vcmp.eq.s32.totalorder %v48, %v72
    %vm81 = vcmask 64512
    %v82 = vsel %vm81, %v15, -inf
    %83 = vmax.xlane.f32.xlu0 %v82
    %v84 = vpop.xlane.xlu0 %83
    %v85 = vsel %vm81, %v16, -inf
    %86 = vmax.xlane.f32.xlu0 %v85
    %v87 = vpop.xlane.xlu0 %86
    %v88 = vsel %vm81, %v17, -inf
    %89 = vmax.xlane.f32.xlu0 %v88
    %v90 = vpop.xlane.xlu0 %89
    %v91 = vsel %vm81, %v18, -inf
    %92 = vmax.xlane.f32.xlu0 %v91
    %v93 = vpop.xlane.xlu0 %92
    %v94 = vsel %vm81, %v19, -inf
    %95 = vmax.xlane.f32.xlu0 %v94
    %v96 = vpop.xlane.xlu0 %95
    %v97 = vsel %vm81, %v20, -inf
    %98 = vmax.xlane.f32.xlu0 %v97
    %v99 = vpop.xlane.xlu0 %98
    %v100 = vsel %vm81, %v21, -inf
    %101 = vmax.xlane.f32.xlu0 %v100
    %v102 = vpop.xlane.xlu0 %101
    %v103 = vsel %vm81, %v22, -inf
    %104 = vmax.xlane.f32.xlu0 %v103
    %v105 = vpop.xlane.xlu0 %104
    %v106 = vsub.f32 %v15, %v84
    %v107 = vsub.f32 %v16, %v87
    %v108 = vsub.f32 %v17, %v90
    %v109 = vsub.f32 %v18, %v93
    %v110 = vsub.f32 %v19, %v96
    %v111 = vsub.f32 %v20, %v99
    %v112 = vsub.f32 %v21, %v102
    %v113 = vsub.f32 %v22, %v105
    %v114 = vmul.f32 %v106, 1.442695
    %v115 = vpow.pop %v114
    %v116 = vmul.f32 %v107, 1.442695
    %v117 = vpow.pop %v116
    %v118 = vmul.f32 %v108, 1.442695
    %v119 = vpow.pop %v118
    %v120 = vmul.f32 %v109, 1.442695
    %v121 = vpow.pop %v120
    %v122 = vmul.f32 %v110, 1.442695
    %v123 = vpow.pop %v122
    %v124 = vmul.f32 %v111, 1.442695
    %v125 = vpow.pop %v124
    %v126 = vmul.f32 %v112, 1.442695
    %v127 = vpow.pop %v126
    %v128 = vmul.f32 %v113, 1.442695
    %v129 = vpow.pop %v128
    %v130 = vsel %vm81, %v115, 0.0
    %131 = vadd.xlane.f32.xlu0 %v130
    %v132 = vpop.xlane.xlu0 %131
    %v133 = vsel %vm81, %v117, 0.0
    %134 = vadd.xlane.f32.xlu0 %v133
    %v135 = vpop.xlane.xlu0 %134
    %v136 = vsel %vm81, %v119, 0.0
    %137 = vadd.xlane.f32.xlu0 %v136
    %v138 = vpop.xlane.xlu0 %137
    %v139 = vsel %vm81, %v121, 0.0
    %140 = vadd.xlane.f32.xlu0 %v139
    %v141 = vpop.xlane.xlu0 %140
    %v142 = vsel %vm81, %v123, 0.0
    %143 = vadd.xlane.f32.xlu0 %v142
    %v144 = vpop.xlane.xlu0 %143
    %v145 = vsel %vm81, %v125, 0.0
    %146 = vadd.xlane.f32.xlu0 %v145
    %v147 = vpop.xlane.xlu0 %146
    %v148 = vsel %vm81, %v127, 0.0
    %149 = vadd.xlane.f32.xlu0 %v148
    %v150 = vpop.xlane.xlu0 %149
    %v151 = vsel %vm81, %v129, 0.0
    %152 = vadd.xlane.f32.xlu0 %v151
    %v153 = vpop.xlane.xlu0 %152
    %v154 = vlog2.pop %v132
    %v155 = vmul.f32 %v154, 0.6931472
    %v156 = vlog2.pop %v135
    %v157 = vmul.f32 %v156, 0.6931472
    %v158 = vlog2.pop %v138
    %v159 = vmul.f32 %v158, 0.6931472
    %v160 = vlog2.pop %v141
    %v161 = vmul.f32 %v160, 0.6931472
    %v162 = vlog2.pop %v144
    %v163 = vmul.f32 %v162, 0.6931472
    %v164 = vlog2.pop %v147
    %v165 = vmul.f32 %v164, 0.6931472
    %v166 = vlog2.pop %v150
    %v167 = vmul.f32 %v166, 0.6931472
    %v168 = vlog2.pop %v153
    %v169 = vmul.f32 %v168, 0.6931472
    %v170 = vadd.f32 %v84, %v155
    %v171 = vadd.f32 %v87, %v157
    %v172 = vadd.f32 %v90, %v159
    %v173 = vadd.f32 %v93, %v161
    %v174 = vadd.f32 %v96, %v163
    %v175 = vadd.f32 %v99, %v165
    %v176 = vadd.f32 %v102, %v167
    %v177 = vadd.f32 %v105, %v169
    %v178 = vsel %vm73, %v15, 0.0
    %v179 = vsel %vm74, %v16, 0.0
    %v180 = vsel %vm75, %v17, 0.0
    %v181 = vsel %vm76, %v18, 0.0
    %v182 = vsel %vm77, %v19, 0.0
    %v183 = vsel %vm78, %v20, 0.0
    %v184 = vsel %vm79, %v21, 0.0
    %v185 = vsel %vm80, %v22, 0.0
    %v186 = vsel %vm81, %v178, 0.0
    %187 = vadd.xlane.f32.xlu0 %v186
    %v188 = vpop.xlane.xlu0 %187
    %v189 = vsel %vm81, %v179, 0.0
    %190 = vadd.xlane.f32.xlu0 %v189
    %v191 = vpop.xlane.xlu0 %190
    %v192 = vsel %vm81, %v180, 0.0
    %193 = vadd.xlane.f32.xlu0 %v192
    %v194 = vpop.xlane.xlu0 %193
    %v195 = vsel %vm81, %v181, 0.0
    %196 = vadd.xlane.f32.xlu0 %v195
    %v197 = vpop.xlane.xlu0 %196
    %v198 = vsel %vm81, %v182, 0.0
    %199 = vadd.xlane.f32.xlu0 %v198
    %v200 = vpop.xlane.xlu0 %199
    %v201 = vsel %vm81, %v183, 0.0
    %202 = vadd.xlane.f32.xlu0 %v201
    %v203 = vpop.xlane.xlu0 %202
    %v204 = vsel %vm81, %v184, 0.0
    %205 = vadd.xlane.f32.xlu0 %v204
    %v206 = vpop.xlane.xlu0 %205
    %v207 = vsel %vm81, %v185, 0.0
    %208 = vadd.xlane.f32.xlu0 %v207
    %v209 = vpop.xlane.xlu0 %208
    %v210 = vsub.f32 %v170, %v188
    %v211 = vsub.f32 %v171, %v191
    %v212 = vsub.f32 %v172, %v194
    %v213 = vsub.f32 %v173, %v197
    %v214 = vsub.f32 %v174, %v200
    %v215 = vsub.f32 %v175, %v203
    %v216 = vsub.f32 %v176, %v206
    %v217 = vsub.f32 %v177, %v209
    %v218 = vsel %vm31, %v210, 0.0
    %v219 = vsel %vm32, %v211, 0.0
    %v220 = vsel %vm33, %v212, 0.0
    %v221 = vsel %vm34, %v213, 0.0
    %v222 = vsel %vm35, %v214, 0.0
    %v223 = vsel %vm36, %v215, 0.0
    %v224 = vsel %vm37, %v216, 0.0
    %v225 = vsel %vm38, %v217, 0.0
    %v226 = vsub.f32 0.0, %v218
    %v227 = vsub.f32 0.0, %v219
    %v228 = vsub.f32 0.0, %v220
    %v229 = vsub.f32 0.0, %v221
    %v230 = vsub.f32 0.0, %v222
    %v231 = vsub.f32 0.0, %v223
    %v232 = vsub.f32 0.0, %v224
    %v233 = vsub.f32 0.0, %v225
    %v234 = vmul.f32 %v226, 1.442695
    %v235 = vpow.pop %v234
    %v236 = vmul.f32 %v227, 1.442695
    %v237 = vpow.pop %v236
    %v238 = vmul.f32 %v228, 1.442695
    %v239 = vpow.pop %v238
    %v240 = vmul.f32 %v229, 1.442695
    %v241 = vpow.pop %v240
    %v242 = vmul.f32 %v230, 1.442695
    %v243 = vpow.pop %v242
    %v244 = vmul.f32 %v231, 1.442695
    %v245 = vpow.pop %v244
    %v246 = vmul.f32 %v232, 1.442695
    %v247 = vpow.pop %v246
    %v248 = vmul.f32 %v233, 1.442695
    %v249 = vpow.pop %v248
    %v250 = vsub.f32 1.0, %v235
    %v251 = vsub.f32 1.0, %v237
    %v252 = vsub.f32 1.0, %v239
    %v253 = vsub.f32 1.0, %v241
    %v254 = vsub.f32 1.0, %v243
    %v255 = vsub.f32 1.0, %v245
    %v256 = vsub.f32 1.0, %v247
    %v257 = vsub.f32 1.0, %v249
    %v258 = vmul.f32 %v250, %v250
    %v259 = vmul.f32 %v251, %v251
    %v260 = vmul.f32 %v252, %v252
    %v261 = vmul.f32 %v253, %v253
    %v262 = vmul.f32 %v254, %v254
    %v263 = vmul.f32 %v255, %v255
    %v264 = vmul.f32 %v256, %v256
    %v265 = vmul.f32 %v257, %v257
    %v266 = vmul.f32 %v258, %v218
    %v267 = vmul.f32 %v259, %v219
    %v268 = vmul.f32 %v260, %v220
    %v269 = vmul.f32 %v261, %v221
    %v270 = vmul.f32 %v262, %v222
    %v271 = vmul.f32 %v263, %v223
    %v272 = vmul.f32 %v264, %v224
    %v273 = vmul.f32 %v265, %v225
    %v274 = vld [vmem:[%s2] sm:$0x1]
    %v276 = vlaneseq
    %v277 = vshrl.u32 %v276, 7
    %v278 = vsub.s32 0, %v277
    %v279 = vrot.slane %v274, %v278
    %v281 = vsel %vm73, %v279, 0.0
    %v282 = vsel %vm74, %v279, 0.0
    %v283 = vsel %vm75, %v279, 0.0
    %v284 = vsel %vm76, %v279, 0.0
    %v285 = vsel %vm77, %v279, 0.0
    %v286 = vsel %vm78, %v279, 0.0
    %v287 = vsel %vm79, %v279, 0.0
    %v288 = vsel %vm80, %v279, 0.0
    %v289 = vsel %vm81, %v281, 0.0
    %290 = vadd.xlane.f32.xlu0 %v289
    %v291 = vpop.xlane.xlu0 %290
    %v292 = vsel %vm81, %v282, 0.0
    %293 = vadd.xlane.f32.xlu0 %v292
    %v294 = vpop.xlane.xlu0 %293
    %v295 = vsel %vm81, %v283, 0.0
    %296 = vadd.xlane.f32.xlu0 %v295
    %v297 = vpop.xlane.xlu0 %296
    %v298 = vsel %vm81, %v284, 0.0
    %299 = vadd.xlane.f32.xlu0 %v298
    %v300 = vpop.xlane.xlu0 %299
    %v301 = vsel %vm81, %v285, 0.0
    %302 = vadd.xlane.f32.xlu0 %v301
    %v303 = vpop.xlane.xlu0 %302
    %v304 = vsel %vm81, %v286, 0.0
    %305 = vadd.xlane.f32.xlu0 %v304
    %v306 = vpop.xlane.xlu0 %305
    %v307 = vsel %vm81, %v287, 0.0
    %308 = vadd.xlane.f32.xlu0 %v307
    %v309 = vpop.xlane.xlu0 %308
    %v310 = vsel %vm81, %v288, 0.0
    %311 = vadd.xlane.f32.xlu0 %v310
    %v312 = vpop.xlane.xlu0 %311
    %v313 = vmul.f32 %v291, %v266
    %v314 = vmul.f32 %v294, %v267
    %v315 = vmul.f32 %v297, %v268
    %v316 = vmul.f32 %v300, %v269
    %v317 = vmul.f32 %v303, %v270
    %v318 = vmul.f32 %v306, %v271
    %v319 = vmul.f32 %v309, %v272
    %v320 = vmul.f32 %v312, %v273
    %v321 = vsel %vm31, %v313, 0.0
    %v322 = vsel %vm32, %v314, 0.0
    %v323 = vsel %vm33, %v315, 0.0
    %v324 = vsel %vm34, %v316, 0.0
    %v325 = vsel %vm35, %v317, 0.0
    %v326 = vsel %vm36, %v318, 0.0
    %v327 = vsel %vm37, %v319, 0.0
    %v328 = vsel %vm38, %v320, 0.0
    %vm329 = vcmask 7168
    %v330 = vsel %vm329, %v321, 0.0
    %v331 = vsel %vm329, %v322, 0.0
    %v332 = vadd.f32 %v330, %v331
    %v333 = vsel %vm329, %v323, 0.0
    %v334 = vadd.f32 %v332, %v333
    %v335 = vsel %vm329, %v324, 0.0
    %v336 = vadd.f32 %v334, %v335
    %v337 = vsel %vm329, %v325, 0.0
    %v338 = vadd.f32 %v336, %v337
    %v339 = vsel %vm329, %v326, 0.0
    %v340 = vadd.f32 %v338, %v339
    %v341 = vsel %vm329, %v327, 0.0
    %v342 = vadd.f32 %v340, %v341
    %v343 = vsel %vm329, %v328, 0.0
    %v344 = vadd.f32 %v342, %v343
    %345 = vadd.xlane.f32.xlu0 %v344
    %v346 = vpop.xlane.xlu0 %345
    %v347 = vrot.slane %v346, 4
    %v348 = vadd.f32 %v346, %v347
    %v349 = vrot.slane %v348, 2
    %v350 = vadd.f32 %v348, %v349
    %v351 = vrot.slane %v350, 1
    %v352 = vadd.f32 %v350, %v351
    %s353 = vtos %v352
    %v354 = vsel %vm31, 1, 0
    %v355 = vsel %vm32, 1, 0
    %v356 = vsel %vm33, 1, 0
    %v357 = vsel %vm34, 1, 0
    %v358 = vsel %vm35, 1, 0
    %v359 = vsel %vm36, 1, 0
    %v360 = vsel %vm37, 1, 0
    %v361 = vsel %vm38, 1, 0
    %v362 = vcvt.s32.f32 %v354
    %v363 = vcvt.s32.f32 %v355
    %v364 = vcvt.s32.f32 %v356
    %v365 = vcvt.s32.f32 %v357
    %v366 = vcvt.s32.f32 %v358
    %v367 = vcvt.s32.f32 %v359
    %v368 = vcvt.s32.f32 %v360
    %v369 = vcvt.s32.f32 %v361
    %v370 = vsel %vm329, %v362, 0.0
    %v371 = vsel %vm329, %v363, 0.0
    %v372 = vadd.f32 %v370, %v371
    %v373 = vsel %vm329, %v364, 0.0
    %v374 = vadd.f32 %v372, %v373
    %v375 = vsel %vm329, %v365, 0.0
    %v376 = vadd.f32 %v374, %v375
    %v377 = vsel %vm329, %v366, 0.0
    %v378 = vadd.f32 %v376, %v377
    %v379 = vsel %vm329, %v367, 0.0
    %v380 = vadd.f32 %v378, %v379
    %v381 = vsel %vm329, %v368, 0.0
    %v382 = vadd.f32 %v380, %v381
    %v383 = vsel %vm329, %v369, 0.0
    %v384 = vadd.f32 %v382, %v383
    %385 = vadd.xlane.f32.xlu0 %v384
    %v386 = vpop.xlane.xlu0 %385
    %v387 = vrot.slane %v386, 4
    %v388 = vadd.f32 %v386, %v387
    %v389 = vrot.slane %v388, 2
    %v390 = vadd.f32 %v388, %v389
    %v391 = vrot.slane %v390, 1
    %v392 = vadd.f32 %v390, %v391
    %s393 = vtos %v392
    %v394 = vstv %s353
    %v395 = vstv %s393
    %vm396 = vcmp.lt.s32.totalorder %v48, 64
    %v397 = vsel %vm396, %v394, %v395
    %398 = vst [vmem:[#allocation2] sm:$0xff] %v397
    // Predicated region
    $region14: #{tpu_custom_call.1} parent=1 // pred_check
      _
    $region15: #{tpu_custom_call.1} parent=1 // pred_check_branch
      %400 = sbr.rel (0) target = $region17
    $region16: #{tpu_custom_call.1} parent=1 // pred_region
      %s402 = ssub.s32 128, 128
      %403 = vsyncadd [#allocation3], %s402
      %s405 = sshll.u32 [#allocation2], 4
      %s406 = int_to_ptr.vmem [resolvable:$true] %s405
      %408 = dma.vmem_to_hbm [thread:$0]  %s406, 128, %s3, [#allocation3]
    $region17: #{tpu_custom_call.1} parent=1 // pred_fallthru
      _
    // Predicated region
    $region18: #{tpu_custom_call.1} parent=1 // pred_check
      _
    $region19: #{tpu_custom_call.1} parent=1 // pred_check_branch
      %410 = sbr.rel (0) target = $region21
    $region20: #{tpu_custom_call.1} parent=1 // pred_region
      %411 = dma.done [#allocation3], 128
    $region21: #{tpu_custom_call.1} parent=1 // pred_fallthru
      _
    %412 = vsyncpa [#allocation3], 1

</llo_original>
